<compile_context>
chip_gen: v6e
topology: v6e:2x2x1
jax: 0.10.0
libtpu: 0.0.40
codegen_flags: <defaults>
</compile_context>

<pallas_src>
import jax
import jax.numpy as jnp
import numpy as np
from jax.experimental import pallas as pl
from jax.experimental.pallas import tpu as pltpu

_LANE_CHUNK = 512        # register-tile width along the batch (lane) axis
_MAX_LANE_GROUPS = 64    # at most 64*128 = 8192 batch lanes per grid step


def _round_up(v, m):
    return -(-v // m) * m


def _cdiv(a, b):
    return -(-a // b)


def precompute_concat_conv1d_params(weight, bias):
    """Hoist t-independent weight preprocessing out of the per-step (ODE-eval) path.

    weight: (C_out, 2*C_in, K) -- in_channels of the conv applied to cat([tt, x], dim=1);
            matches the module only for dim_in == 1.
    bias:   (C_out,)
    """
    C_out, C_tot, K = weight.shape
    assert C_tot % 2 == 0, "concat doubles channels; module requires dim_in == 1"
    C_in = C_tot // 2
    w32 = weight.astype(jnp.float32)
    # x-channel weights flattened with index [k, o, c] -> (k*C_out + o)*C_in + c
    w_flat = jnp.transpose(w32[:, C_in:, :], (2, 0, 1)).reshape(K * C_out * C_in)
    # tt channel contributes t * sum_{c,k} W[o, c, k] at every output position
    # (only valid for stride=1, padding=0, dilation=1, groups=1, transpose=False).
    sum_w = jnp.sum(w32[:, :C_in, :], axis=(1, 2))               # (C_out,)
    return {"w_flat": w_flat, "sum_w": sum_w,
            "bias": bias.astype(jnp.float32), "shape": (C_out, C_in, K)}


def _concat_conv1d_kernel(x_ref, w_ref, b_ref, o_ref):
    # x_ref: (C_in, L, NB)        VMEM  -- batch on the lane axis
    # w_ref: (K*C_out*C_in,) f32  SMEM  -- x-channel weights, index [k, o, c]
    # b_ref: (C_out,)        f32  SMEM  -- effective bias (conv bias + t*sum of tt weights)
    # o_ref: (C_out, L_out, NB)   VMEM
    C_out, L_out, NB = o_ref.shape
    C_in = x_ref.shape[0]
    L = x_ref.shape[1]
    K = L - L_out + 1

    # Statically unrolled: K, C_in, C_out and the chunk count are all tiny.
    # Per (k, c): the k-shift is a sublane-offset load straight from the ref (vld/XLU
    # slots), the compute is one scalar-weight FMA over a lane-dense (L_out, chunk) slab
    # (VALU). Each chunk's accumulator is stored before the next chunk starts, which
    # bounds the vreg live range regardless of the batch block size.
    for n0 in range(0, NB, _LANE_CHUNK):
        nc = min(_LANE_CHUNK, NB - n0)
        for o in range(C_out):
            acc = jnp.full((L_out, nc), b_ref[o], jnp.float32)
            for k in range(K):
                for c in range(C_in):
                    w = w_ref[(k * C_out + o) * C_in + c]
                    xs = x_ref[c, k:k + L_out, n0:n0 + nc].astype(jnp.float32)
                    acc = acc + w * xs
            o_ref[o, :, n0:n0 + nc] = acc.astype(o_ref.dtype)
    # TODO(synk): if this module is ever used with K*C_in in the ~64-256 range, switch to
    # an im2col jnp.dot (MXU) path; at contraction depth K*C_in=3 the VPU path is correct.
    # TODO(synk): on v6e/v7x a bf16 multiply (f32 accumulate) path would halve load
    # pressure for bf16 inputs; kept all-f32 math for v5e safety.


def concat_conv1d(t, x, weight=None, bias=None, *, params=None,
                  stride=1, padding=0, dilation=1, groups=1, transpose=False,
                  batch_block=None, num_cores=1, vmem_limit_bytes=None):
    """t: scalar, x: (N, C_in, L). Either pass (weight, bias) or a precomputed `params`.

    num_cores: pass 2 on v7x so the 'parallel' batch grid axis can shard over both
    TensorCores; on v5e/v6e (1 TC) leave at 1 (extra grid steps are a pure serial loop).
    """
    if stride != 1 or padding != 0 or dilation != 1 or groups != 1 or transpose:
        raise NotImplementedError(
            "ConcatConv1d Pallas kernel supports only the module defaults "
            "(stride=1, padding=0, dilation=1, groups=1, transpose=False); "
            "the tt-channel fold into the bias is invalid otherwise.")

    N, C_in, L = x.shape
    if params is None:
        params = precompute_concat_conv1d_params(weight, bias)
    C_out, C_in_w, K = params["shape"]
    assert C_in_w == C_in, "weight in_channels must equal 2*dim_in (module needs dim_in==1)"
    assert L >= K, "L_out would be non-positive"
    L_out = L - K + 1

    # Per-call scalar work only: effective bias folds the (constant) tt channel.
    b_eff = params["bias"] + jnp.asarray(t, jnp.float32) * params["sum_w"]   # (C_out,)
    w_flat = params["w_flat"]                                                # (K*C_out*C_in,)

    # Lane-dense layout: batch on the lane (last) axis.
    x_t = jnp.transpose(x, (1, 2, 0))                                        # (C_in, L, N)

    itemsize = np.dtype(x.dtype).itemsize
    if batch_block is None:
        groups_total = _cdiv(N, 128)
        want_steps = max(int(num_cores), 1)
        if groups_total <= 1 and want_steps <= 1:
            batch_block = N
        else:
            # VMEM per 128-lane group: double-buffered x + out blocks incl. (8,128) padding.
            bytes_per_group = 2 * itemsize * 128 * (
                C_in * _round_up(L, 8) + C_out * _round_up(L_out, 8))
            max_groups = max(1, min(_MAX_LANE_GROUPS, (24 << 20) // bytes_per_group))
            groups_per_step = max(1, min(max_groups, _cdiv(groups_total, want_steps)))
            if groups_per_step >= groups_total and want_steps <= 1:
                batch_block = N                      # everything fits in one step
            else:
                batch_block = groups_per_step * 128  # multiple of 128 -> lane constraint OK
    if batch_block != N:
        assert batch_block % 128 == 0, "batch_block must be a multiple of 128 (or equal N)"

    N_pad = _round_up(N, batch_block)
    n_steps = N_pad // batch_block
    if N_pad != N:
        x_t = jnp.pad(x_t, ((0, 0), (0, 0), (0, N_pad - N)))

    if vmem_limit_bytes is None:
        lanes = _round_up(batch_block, 128)
        block_bytes = 2 * itemsize * lanes * (
            C_in * _round_up(L, 8) + C_out * _round_up(L_out, 8))
        # Explicit limit: enough for the double-buffered blocks + slack, but always safe
        # on v7x's 64 MiB physical VMEM as well as v5e/v6e's 128 MiB.
        vmem_limit_bytes = int(min(max(block_bytes + (4 << 20), 16 << 20), 48 << 20))

    y = pl.pallas_call(
        _concat_conv1d_kernel,
        out_shape=jax.ShapeDtypeStruct((C_out, L_out, N_pad), x.dtype),
        grid_spec=pltpu.PrefetchScalarGridSpec(
            num_scalar_prefetch=0,
            grid=(n_steps,),
            in_specs=[
                pl.BlockSpec((C_in, L, batch_block), lambda n: (0, 0, n)),      # x block
                pl.BlockSpec(memory_space=pltpu.MemorySpace.SMEM),              # w_flat
                pl.BlockSpec(memory_space=pltpu.MemorySpace.SMEM),              # b_eff
            ],
            out_specs=pl.BlockSpec((C_out, L_out, batch_block), lambda n: (0, 0, n)),
        ),
        compiler_params=pltpu.CompilerParams(
            dimension_semantics=("parallel",),
            vmem_limit_bytes=vmem_limit_bytes),
    )(x_t, w_flat, b_eff)

    y = jnp.transpose(y, (2, 0, 1))                                           # (N_pad, C_out, L_out)
    return y[:N] if N_pad != N else y


def _reference(t, x, weight, bias):
    tt = jnp.ones_like(x) * t
    ttx = jnp.concatenate([tt, x], axis=1)
    y = jax.lax.conv_general_dilated(
        ttx, weight, window_strides=(1,), padding="VALID",
        dimension_numbers=("NCH", "OIH", "NCH"))
    return y + bias[None, :, None]


if __name__ == "__main__":
    key = jax.random.PRNGKey(0)
    k_x1, k_x2, k_x3, k_w, k_b = jax.random.split(key, 5)

    # Small shapes consistent with the module: dim_in must be 1 for the concat
    # (doubling channels) to match conv in_channels = dim_in + 1.
    dim_in, dim_out, L, K = 1, 8, 16, 3
    in_ch = dim_in + 1
    fan_in = in_ch * K
    bound = 1.0 / np.sqrt(fan_in)
    weight = jax.random.uniform(k_w, (dim_out, in_ch, K), jnp.float32, -bound, bound)
    bias = jax.random.uniform(k_b, (dim_out,), jnp.float32, -bound, bound)
    t = jnp.float32(0.5)

    # Hoisted once (as an ODE integrator would do), reused across calls.
    params = precompute_concat_conv1d_params(weight, bias)

    # 1) Module-sized case: one grid step, batch of 2.
    x1 = jax.random.normal(k_x1, (2, dim_in, L), jnp.float32)
    y1 = jax.block_until_ready(concat_conv1d(t, x1, params=params))
    assert y1.shape == (2, dim_out, L - K + 1)
    assert np.allclose(np.asarray(y1), np.asarray(_reference(t, x1, weight, bias)),
                       atol=1e-5, rtol=1e-5)

    # 2) Blocked + padded batch, >=2 grid steps ("parallel" axis; v7x two-TC path).
    x2 = jax.random.normal(k_x2, (333, dim_in, L), jnp.float32)
    y2 = jax.block_until_ready(concat_conv1d(t, x2, params=params, num_cores=2))
    assert np.allclose(np.asarray(y2), np.asarray(_reference(t, x2, weight, bias)),
                       atol=1e-5, rtol=1e-5)

    # 3) Single large block exercising the in-kernel 512-lane chunk loop.
    x3 = jax.random.normal(k_x3, (1536, dim_in, L), jnp.float32)
    y3 = jax.block_until_ready(concat_conv1d(t, x3, weight, bias))
    assert np.allclose(np.asarray(y3), np.asarray(_reference(t, x3, weight, bias)),
                       atol=1e-5, rtol=1e-5)

    print("KERNEL_OK")
</pallas_src>

<mosaic_0001>
module attributes {stable_mosaic.version = 11 : i64} {
  func.func @_concat_conv1d_kernel(%arg0: i32, %arg1: memref<1x16x2xf32, #tpu.memory_space<vmem>>, %arg2: memref<24xf32, #tpu.memory_space<smem>>, %arg3: memref<8xf32, #tpu.memory_space<smem>>, %arg4: memref<8x14x2xf32, #tpu.memory_space<vmem>>) attributes {dimension_semantics = [#tpu.dimension_semantics<parallel>], iteration_bounds = array<i64: 1>, scalar_prefetch = 0 : i64, scratch_operands = 0 : i64, tpu.core_type = #tpu.core_type<tc>, window_params = [{transform_indices = @transform_0, window_bounds = array<i64: 1, 16, 2>}, {transform_indices = @transform_1, window_bounds = array<i64: 24>}, {transform_indices = @transform_2, window_bounds = array<i64: 8>}, {transform_indices = @transform_3, window_bounds = array<i64: 8, 14, 2>}]} {
    %c0 = arith.constant 0 : index
    %0 = memref.load %arg3[%c0] : memref<8xf32, #tpu.memory_space<smem>>
    %1 = vector.broadcast %0 : f32 to vector<14x2xf32>
    %c0_0 = arith.constant 0 : index
    %2 = memref.load %arg2[%c0_0] : memref<24xf32, #tpu.memory_space<smem>>
    %c0_1 = arith.constant 0 : index
    %c0_2 = arith.constant 0 : index
    %c0_3 = arith.constant 0 : index
    %3 = vector.load %arg1[%c0_1, %c0_2, %c0_3] : memref<1x16x2xf32, #tpu.memory_space<vmem>>, vector<1x14x2xf32>
    %4 = vector.shape_cast %3 : vector<1x14x2xf32> to vector<14x2xf32>
    %5 = vector.broadcast %2 : f32 to vector<14x2xf32>
    %6 = arith.mulf %5, %4 : vector<14x2xf32>
    %7 = arith.addf %1, %6 : vector<14x2xf32>
    %c8 = arith.constant 8 : index
    %8 = memref.load %arg2[%c8] : memref<24xf32, #tpu.memory_space<smem>>
    %c0_4 = arith.constant 0 : index
    %c1 = arith.constant 1 : index
    %c0_5 = arith.constant 0 : index
    %9 = vector.load %arg1[%c0_4, %c1, %c0_5] : memref<1x16x2xf32, #tpu.memory_space<vmem>>, vector<1x14x2xf32>
    %10 = vector.shape_cast %9 : vector<1x14x2xf32> to vector<14x2xf32>
    %11 = vector.broadcast %8 : f32 to vector<14x2xf32>
    %12 = arith.mulf %11, %10 : vector<14x2xf32>
    %13 = arith.addf %7, %12 : vector<14x2xf32>
    %c16 = arith.constant 16 : index
    %14 = memref.load %arg2[%c16] : memref<24xf32, #tpu.memory_space<smem>>
    %c0_6 = arith.constant 0 : index
    %c2 = arith.constant 2 : index
    %c0_7 = arith.constant 0 : index
    %15 = vector.load %arg1[%c0_6, %c2, %c0_7] : memref<1x16x2xf32, #tpu.memory_space<vmem>>, vector<1x14x2xf32>
    %16 = vector.shape_cast %15 : vector<1x14x2xf32> to vector<14x2xf32>
    %17 = vector.broadcast %14 : f32 to vector<14x2xf32>
    %18 = arith.mulf %17, %16 : vector<14x2xf32>
    %19 = arith.addf %13, %18 : vector<14x2xf32>
    %c0_8 = arith.constant 0 : index
    %c0_9 = arith.constant 0 : index
    %c0_10 = arith.constant 0 : index
    %20 = vector.load %arg4[%c0_8, %c0_9, %c0_10] : memref<8x14x2xf32, #tpu.memory_space<vmem>>, vector<1x14x2xf32>
    %21 = vector.shape_cast %20 : vector<1x14x2xf32> to vector<14x2xf32>
    %22 = vector.shape_cast %19 : vector<14x2xf32> to vector<1x14x2xf32>
    tpu.vector_store %arg4[%c0_8, %c0_9, %c0_10], %22 {strides = array<i32>} : memref<8x14x2xf32, #tpu.memory_space<vmem>>, vector<1x14x2xf32>,
    %c1_11 = arith.constant 1 : index
    %23 = memref.load %arg3[%c1_11] : memref<8xf32, #tpu.memory_space<smem>>
    %24 = vector.broadcast %23 : f32 to vector<14x2xf32>
    %c1_12 = arith.constant 1 : index
    %25 = memref.load %arg2[%c1_12] : memref<24xf32, #tpu.memory_space<smem>>
    %c0_13 = arith.constant 0 : index
    %c0_14 = arith.constant 0 : index
    %c0_15 = arith.constant 0 : index
    %26 = vector.load %arg1[%c0_13, %c0_14, %c0_15] : memref<1x16x2xf32, #tpu.memory_space<vmem>>, vector<1x14x2xf32>
    %27 = vector.shape_cast %26 : vector<1x14x2xf32> to vector<14x2xf32>
    %28 = vector.broadcast %25 : f32 to vector<14x2xf32>
    %29 = arith.mulf %28, %27 : vector<14x2xf32>
    %30 = arith.addf %24, %29 : vector<14x2xf32>
    %c9 = arith.constant 9 : index
    %31 = memref.load %arg2[%c9] : memref<24xf32, #tpu.memory_space<smem>>
    %c0_16 = arith.constant 0 : index
    %c1_17 = arith.constant 1 : index
    %c0_18 = arith.constant 0 : index
    %32 = vector.load %arg1[%c0_16, %c1_17, %c0_18] : memref<1x16x2xf32, #tpu.memory_space<vmem>>, vector<1x14x2xf32>
    %33 = vector.shape_cast %32 : vector<1x14x2xf32> to vector<14x2xf32>
    %34 = vector.broadcast %31 : f32 to vector<14x2xf32>
    %35 = arith.mulf %34, %33 : vector<14x2xf32>
    %36 = arith.addf %30, %35 : vector<14x2xf32>
    %c17 = arith.constant 17 : index
    %37 = memref.load %arg2[%c17] : memref<24xf32, #tpu.memory_space<smem>>
    %c0_19 = arith.constant 0 : index
    %c2_20 = arith.constant 2 : index
    %c0_21 = arith.constant 0 : index
    %38 = vector.load %arg1[%c0_19, %c2_20, %c0_21] : memref<1x16x2xf32, #tpu.memory_space<vmem>>, vector<1x14x2xf32>
    %39 = vector.shape_cast %38 : vector<1x14x2xf32> to vector<14x2xf32>
    %40 = vector.broadcast %37 : f32 to vector<14x2xf32>
    %41 = arith.mulf %40, %39 : vector<14x2xf32>
    %42 = arith.addf %36, %41 : vector<14x2xf32>
    %c1_22 = arith.constant 1 : index
    %c0_23 = arith.constant 0 : index
    %c0_24 = arith.constant 0 : index
    %43 = vector.load %arg4[%c1_22, %c0_23, %c0_24] : memref<8x14x2xf32, #tpu.memory_space<vmem>>, vector<1x14x2xf32>
    %44 = vector.shape_cast %43 : vector<1x14x2xf32> to vector<14x2xf32>
    %45 = vector.shape_cast %42 : vector<14x2xf32> to vector<1x14x2xf32>
    tpu.vector_store %arg4[%c1_22, %c0_23, %c0_24], %45 {strides = array<i32>} : memref<8x14x2xf32, #tpu.memory_space<vmem>>, vector<1x14x2xf32>,
    %c2_25 = arith.constant 2 : index
    %46 = memref.load %arg3[%c2_25] : memref<8xf32, #tpu.memory_space<smem>>
    %47 = vector.broadcast %46 : f32 to vector<14x2xf32>
    %c2_26 = arith.constant 2 : index
    %48 = memref.load %arg2[%c2_26] : memref<24xf32, #tpu.memory_space<smem>>
    %c0_27 = arith.constant 0 : index
    %c0_28 = arith.constant 0 : index
    %c0_29 = arith.constant 0 : index
    %49 = vector.load %arg1[%c0_27, %c0_28, %c0_29] : memref<1x16x2xf32, #tpu.memory_space<vmem>>, vector<1x14x2xf32>
    %50 = vector.shape_cast %49 : vector<1x14x2xf32> to vector<14x2xf32>
    %51 = vector.broadcast %48 : f32 to vector<14x2xf32>
    %52 = arith.mulf %51, %50 : vector<14x2xf32>
    %53 = arith.addf %47, %52 : vector<14x2xf32>
    %c10 = arith.constant 10 : index
    %54 = memref.load %arg2[%c10] : memref<24xf32, #tpu.memory_space<smem>>
    %c0_30 = arith.constant 0 : index
    %c1_31 = arith.constant 1 : index
    %c0_32 = arith.constant 0 : index
    %55 = vector.load %arg1[%c0_30, %c1_31, %c0_32] : memref<1x16x2xf32, #tpu.memory_space<vmem>>, vector<1x14x2xf32>
    %56 = vector.shape_cast %55 : vector<1x14x2xf32> to vector<14x2xf32>
    %57 = vector.broadcast %54 : f32 to vector<14x2xf32>
    %58 = arith.mulf %57, %56 : vector<14x2xf32>
    %59 = arith.addf %53, %58 : vector<14x2xf32>
    %c18 = arith.constant 18 : index
    %60 = memref.load %arg2[%c18] : memref<24xf32, #tpu.memory_space<smem>>
    %c0_33 = arith.constant 0 : index
    %c2_34 = arith.constant 2 : index
    %c0_35 = arith.constant 0 : index
    %61 = vector.load %arg1[%c0_33, %c2_34, %c0_35] : memref<1x16x2xf32, #tpu.memory_space<vmem>>, vector<1x14x2xf32>
    %62 = vector.shape_cast %61 : vector<1x14x2xf32> to vector<14x2xf32>
    %63 = vector.broadcast %60 : f32 to vector<14x2xf32>
    %64 = arith.mulf %63, %62 : vector<14x2xf32>
    %65 = arith.addf %59, %64 : vector<14x2xf32>
    %c2_36 = arith.constant 2 : index
    %c0_37 = arith.constant 0 : index
    %c0_38 = arith.constant 0 : index
    %66 = vector.load %arg4[%c2_36, %c0_37, %c0_38] : memref<8x14x2xf32, #tpu.memory_space<vmem>>, vector<1x14x2xf32>
    %67 = vector.shape_cast %66 : vector<1x14x2xf32> to vector<14x2xf32>
    %68 = vector.shape_cast %65 : vector<14x2xf32> to vector<1x14x2xf32>
    tpu.vector_store %arg4[%c2_36, %c0_37, %c0_38], %68 {strides = array<i32>} : memref<8x14x2xf32, #tpu.memory_space<vmem>>, vector<1x14x2xf32>,
    %c3 = arith.constant 3 : index
    %69 = memref.load %arg3[%c3] : memref<8xf32, #tpu.memory_space<smem>>
    %70 = vector.broadcast %69 : f32 to vector<14x2xf32>
    %c3_39 = arith.constant 3 : index
    %71 = memref.load %arg2[%c3_39] : memref<24xf32, #tpu.memory_space<smem>>
    %c0_40 = arith.constant 0 : index
    %c0_41 = arith.constant 0 : index
    %c0_42 = arith.constant 0 : index
    %72 = vector.load %arg1[%c0_40, %c0_41, %c0_42] : memref<1x16x2xf32, #tpu.memory_space<vmem>>, vector<1x14x2xf32>
    %73 = vector.shape_cast %72 : vector<1x14x2xf32> to vector<14x2xf32>
    %74 = vector.broadcast %71 : f32 to vector<14x2xf32>
    %75 = arith.mulf %74, %73 : vector<14x2xf32>
    %76 = arith.addf %70, %75 : vector<14x2xf32>
    %c11 = arith.constant 11 : index
    %77 = memref.load %arg2[%c11] : memref<24xf32, #tpu.memory_space<smem>>
    %c0_43 = arith.constant 0 : index
    %c1_44 = arith.constant 1 : index
    %c0_45 = arith.constant 0 : index
    %78 = vector.load %arg1[%c0_43, %c1_44, %c0_45] : memref<1x16x2xf32, #tpu.memory_space<vmem>>, vector<1x14x2xf32>
    %79 = vector.shape_cast %78 : vector<1x14x2xf32> to vector<14x2xf32>
    %80 = vector.broadcast %77 : f32 to vector<14x2xf32>
    %81 = arith.mulf %80, %79 : vector<14x2xf32>
    %82 = arith.addf %76, %81 : vector<14x2xf32>
    %c19 = arith.constant 19 : index
    %83 = memref.load %arg2[%c19] : memref<24xf32, #tpu.memory_space<smem>>
    %c0_46 = arith.constant 0 : index
    %c2_47 = arith.constant 2 : index
    %c0_48 = arith.constant 0 : index
    %84 = vector.load %arg1[%c0_46, %c2_47, %c0_48] : memref<1x16x2xf32, #tpu.memory_space<vmem>>, vector<1x14x2xf32>
    %85 = vector.shape_cast %84 : vector<1x14x2xf32> to vector<14x2xf32>
    %86 = vector.broadcast %83 : f32 to vector<14x2xf32>
    %87 = arith.mulf %86, %85 : vector<14x2xf32>
    %88 = arith.addf %82, %87 : vector<14x2xf32>
    %c3_49 = arith.constant 3 : index
    %c0_50 = arith.constant 0 : index
    %c0_51 = arith.constant 0 : index
    %89 = vector.load %arg4[%c3_49, %c0_50, %c0_51] : memref<8x14x2xf32, #tpu.memory_space<vmem>>, vector<1x14x2xf32>
    %90 = vector.shape_cast %89 : vector<1x14x2xf32> to vector<14x2xf32>
    %91 = vector.shape_cast %88 : vector<14x2xf32> to vector<1x14x2xf32>
    tpu.vector_store %arg4[%c3_49, %c0_50, %c0_51], %91 {strides = array<i32>} : memref<8x14x2xf32, #tpu.memory_space<vmem>>, vector<1x14x2xf32>,
    %c4 = arith.constant 4 : index
    %92 = memref.load %arg3[%c4] : memref<8xf32, #tpu.memory_space<smem>>
    %93 = vector.broadcast %92 : f32 to vector<14x2xf32>
    %c4_52 = arith.constant 4 : index
    %94 = memref.load %arg2[%c4_52] : memref<24xf32, #tpu.memory_space<smem>>
    %c0_53 = arith.constant 0 : index
    %c0_54 = arith.constant 0 : index
    %c0_55 = arith.constant 0 : index
    %95 = vector.load %arg1[%c0_53, %c0_54, %c0_55] : memref<1x16x2xf32, #tpu.memory_space<vmem>>, vector<1x14x2xf32>
    %96 = vector.shape_cast %95 : vector<1x14x2xf32> to vector<14x2xf32>
    %97 = vector.broadcast %94 : f32 to vector<14x2xf32>
    %98 = arith.mulf %97, %96 : vector<14x2xf32>
    %99 = arith.addf %93, %98 : vector<14x2xf32>
    %c12 = arith.constant 12 : index
    %100 = memref.load %arg2[%c12] : memref<24xf32, #tpu.memory_space<smem>>
    %c0_56 = arith.constant 0 : index
    %c1_57 = arith.constant 1 : index
    %c0_58 = arith.constant 0 : index
    %101 = vector.load %arg1[%c0_56, %c1_57, %c0_58] : memref<1x16x2xf32, #tpu.memory_space<vmem>>, vector<1x14x2xf32>
    %102 = vector.shape_cast %101 : vector<1x14x2xf32> to vector<14x2xf32>
    %103 = vector.broadcast %100 : f32 to vector<14x2xf32>
    %104 = arith.mulf %103, %102 : vector<14x2xf32>
    %105 = arith.addf %99, %104 : vector<14x2xf32>
    %c20 = arith.constant 20 : index
    %106 = memref.load %arg2[%c20] : memref<24xf32, #tpu.memory_space<smem>>
    %c0_59 = arith.constant 0 : index
    %c2_60 = arith.constant 2 : index
    %c0_61 = arith.constant 0 : index
    %107 = vector.load %arg1[%c0_59, %c2_60, %c0_61] : memref<1x16x2xf32, #tpu.memory_space<vmem>>, vector<1x14x2xf32>
    %108 = vector.shape_cast %107 : vector<1x14x2xf32> to vector<14x2xf32>
    %109 = vector.broadcast %106 : f32 to vector<14x2xf32>
    %110 = arith.mulf %109, %108 : vector<14x2xf32>
    %111 = arith.addf %105, %110 : vector<14x2xf32>
    %c4_62 = arith.constant 4 : index
    %c0_63 = arith.constant 0 : index
    %c0_64 = arith.constant 0 : index
    %112 = vector.load %arg4[%c4_62, %c0_63, %c0_64] : memref<8x14x2xf32, #tpu.memory_space<vmem>>, vector<1x14x2xf32>
    %113 = vector.shape_cast %112 : vector<1x14x2xf32> to vector<14x2xf32>
    %114 = vector.shape_cast %111 : vector<14x2xf32> to vector<1x14x2xf32>
    tpu.vector_store %arg4[%c4_62, %c0_63, %c0_64], %114 {strides = array<i32>} : memref<8x14x2xf32, #tpu.memory_space<vmem>>, vector<1x14x2xf32>,
    %c5 = arith.constant 5 : index
    %115 = memref.load %arg3[%c5] : memref<8xf32, #tpu.memory_space<smem>>
    %116 = vector.broadcast %115 : f32 to vector<14x2xf32>
    %c5_65 = arith.constant 5 : index
    %117 = memref.load %arg2[%c5_65] : memref<24xf32, #tpu.memory_space<smem>>
    %c0_66 = arith.constant 0 : index
    %c0_67 = arith.constant 0 : index
    %c0_68 = arith.constant 0 : index
    %118 = vector.load %arg1[%c0_66, %c0_67, %c0_68] : memref<1x16x2xf32, #tpu.memory_space<vmem>>, vector<1x14x2xf32>
    %119 = vector.shape_cast %118 : vector<1x14x2xf32> to vector<14x2xf32>
    %120 = vector.broadcast %117 : f32 to vector<14x2xf32>
    %121 = arith.mulf %120, %119 : vector<14x2xf32>
    %122 = arith.addf %116, %121 : vector<14x2xf32>
    %c13 = arith.constant 13 : index
    %123 = memref.load %arg2[%c13] : memref<24xf32, #tpu.memory_space<smem>>
    %c0_69 = arith.constant 0 : index
    %c1_70 = arith.constant 1 : index
    %c0_71 = arith.constant 0 : index
    %124 = vector.load %arg1[%c0_69, %c1_70, %c0_71] : memref<1x16x2xf32, #tpu.memory_space<vmem>>, vector<1x14x2xf32>
    %125 = vector.shape_cast %124 : vector<1x14x2xf32> to vector<14x2xf32>
    %126 = vector.broadcast %123 : f32 to vector<14x2xf32>
    %127 = arith.mulf %126, %125 : vector<14x2xf32>
    %128 = arith.addf %122, %127 : vector<14x2xf32>
    %c21 = arith.constant 21 : index
    %129 = memref.load %arg2[%c21] : memref<24xf32, #tpu.memory_space<smem>>
    %c0_72 = arith.constant 0 : index
    %c2_73 = arith.constant 2 : index
    %c0_74 = arith.constant 0 : index
    %130 = vector.load %arg1[%c0_72, %c2_73, %c0_74] : memref<1x16x2xf32, #tpu.memory_space<vmem>>, vector<1x14x2xf32>
    %131 = vector.shape_cast %130 : vector<1x14x2xf32> to vector<14x2xf32>
    %132 = vector.broadcast %129 : f32 to vector<14x2xf32>
    %133 = arith.mulf %132, %131 : vector<14x2xf32>
    %134 = arith.addf %128, %133 : vector<14x2xf32>
    %c5_75 = arith.constant 5 : index
    %c0_76 = arith.constant 0 : index
    %c0_77 = arith.constant 0 : index
    %135 = vector.load %arg4[%c5_75, %c0_76, %c0_77] : memref<8x14x2xf32, #tpu.memory_space<vmem>>, vector<1x14x2xf32>
    %136 = vector.shape_cast %135 : vector<1x14x2xf32> to vector<14x2xf32>
    %137 = vector.shape_cast %134 : vector<14x2xf32> to vector<1x14x2xf32>
    tpu.vector_store %arg4[%c5_75, %c0_76, %c0_77], %137 {strides = array<i32>} : memref<8x14x2xf32, #tpu.memory_space<vmem>>, vector<1x14x2xf32>,
    %c6 = arith.constant 6 : index
    %138 = memref.load %arg3[%c6] : memref<8xf32, #tpu.memory_space<smem>>
    %139 = vector.broadcast %138 : f32 to vector<14x2xf32>
    %c6_78 = arith.constant 6 : index
    %140 = memref.load %arg2[%c6_78] : memref<24xf32, #tpu.memory_space<smem>>
    %c0_79 = arith.constant 0 : index
    %c0_80 = arith.constant 0 : index
    %c0_81 = arith.constant 0 : index
    %141 = vector.load %arg1[%c0_79, %c0_80, %c0_81] : memref<1x16x2xf32, #tpu.memory_space<vmem>>, vector<1x14x2xf32>
    %142 = vector.shape_cast %141 : vector<1x14x2xf32> to vector<14x2xf32>
    %143 = vector.broadcast %140 : f32 to vector<14x2xf32>
    %144 = arith.mulf %143, %142 : vector<14x2xf32>
    %145 = arith.addf %139, %144 : vector<14x2xf32>
    %c14 = arith.constant 14 : index
    %146 = memref.load %arg2[%c14] : memref<24xf32, #tpu.memory_space<smem>>
    %c0_82 = arith.constant 0 : index
    %c1_83 = arith.constant 1 : index
    %c0_84 = arith.constant 0 : index
    %147 = vector.load %arg1[%c0_82, %c1_83, %c0_84] : memref<1x16x2xf32, #tpu.memory_space<vmem>>, vector<1x14x2xf32>
    %148 = vector.shape_cast %147 : vector<1x14x2xf32> to vector<14x2xf32>
    %149 = vector.broadcast %146 : f32 to vector<14x2xf32>
    %150 = arith.mulf %149, %148 : vector<14x2xf32>
    %151 = arith.addf %145, %150 : vector<14x2xf32>
    %c22 = arith.constant 22 : index
    %152 = memref.load %arg2[%c22] : memref<24xf32, #tpu.memory_space<smem>>
    %c0_85 = arith.constant 0 : index
    %c2_86 = arith.constant 2 : index
    %c0_87 = arith.constant 0 : index
    %153 = vector.load %arg1[%c0_85, %c2_86, %c0_87] : memref<1x16x2xf32, #tpu.memory_space<vmem>>, vector<1x14x2xf32>
    %154 = vector.shape_cast %153 : vector<1x14x2xf32> to vector<14x2xf32>
    %155 = vector.broadcast %152 : f32 to vector<14x2xf32>
    %156 = arith.mulf %155, %154 : vector<14x2xf32>
    %157 = arith.addf %151, %156 : vector<14x2xf32>
    %c6_88 = arith.constant 6 : index
    %c0_89 = arith.constant 0 : index
    %c0_90 = arith.constant 0 : index
    %158 = vector.load %arg4[%c6_88, %c0_89, %c0_90] : memref<8x14x2xf32, #tpu.memory_space<vmem>>, vector<1x14x2xf32>
    %159 = vector.shape_cast %158 : vector<1x14x2xf32> to vector<14x2xf32>
    %160 = vector.shape_cast %157 : vector<14x2xf32> to vector<1x14x2xf32>
    tpu.vector_store %arg4[%c6_88, %c0_89, %c0_90], %160 {strides = array<i32>} : memref<8x14x2xf32, #tpu.memory_space<vmem>>, vector<1x14x2xf32>,
    %c7 = arith.constant 7 : index
    %161 = memref.load %arg3[%c7] : memref<8xf32, #tpu.memory_space<smem>>
    %162 = vector.broadcast %161 : f32 to vector<14x2xf32>
    %c7_91 = arith.constant 7 : index
    %163 = memref.load %arg2[%c7_91] : memref<24xf32, #tpu.memory_space<smem>>
    %c0_92 = arith.constant 0 : index
    %c0_93 = arith.constant 0 : index
    %c0_94 = arith.constant 0 : index
    %164 = vector.load %arg1[%c0_92, %c0_93, %c0_94] : memref<1x16x2xf32, #tpu.memory_space<vmem>>, vector<1x14x2xf32>
    %165 = vector.shape_cast %164 : vector<1x14x2xf32> to vector<14x2xf32>
    %166 = vector.broadcast %163 : f32 to vector<14x2xf32>
    %167 = arith.mulf %166, %165 : vector<14x2xf32>
    %168 = arith.addf %162, %167 : vector<14x2xf32>
    %c15 = arith.constant 15 : index
    %169 = memref.load %arg2[%c15] : memref<24xf32, #tpu.memory_space<smem>>
    %c0_95 = arith.constant 0 : index
    %c1_96 = arith.constant 1 : index
    %c0_97 = arith.constant 0 : index
    %170 = vector.load %arg1[%c0_95, %c1_96, %c0_97] : memref<1x16x2xf32, #tpu.memory_space<vmem>>, vector<1x14x2xf32>
    %171 = vector.shape_cast %170 : vector<1x14x2xf32> to vector<14x2xf32>
    %172 = vector.broadcast %169 : f32 to vector<14x2xf32>
    %173 = arith.mulf %172, %171 : vector<14x2xf32>
    %174 = arith.addf %168, %173 : vector<14x2xf32>
    %c23 = arith.constant 23 : index
    %175 = memref.load %arg2[%c23] : memref<24xf32, #tpu.memory_space<smem>>
    %c0_98 = arith.constant 0 : index
    %c2_99 = arith.constant 2 : index
    %c0_100 = arith.constant 0 : index
    %176 = vector.load %arg1[%c0_98, %c2_99, %c0_100] : memref<1x16x2xf32, #tpu.memory_space<vmem>>, vector<1x14x2xf32>
    %177 = vector.shape_cast %176 : vector<1x14x2xf32> to vector<14x2xf32>
    %178 = vector.broadcast %175 : f32 to vector<14x2xf32>
    %179 = arith.mulf %178, %177 : vector<14x2xf32>
    %180 = arith.addf %174, %179 : vector<14x2xf32>
    %c7_101 = arith.constant 7 : index
    %c0_102 = arith.constant 0 : index
    %c0_103 = arith.constant 0 : index
    %181 = vector.load %arg4[%c7_101, %c0_102, %c0_103] : memref<8x14x2xf32, #tpu.memory_space<vmem>>, vector<1x14x2xf32>
    %182 = vector.shape_cast %181 : vector<1x14x2xf32> to vector<14x2xf32>
    %183 = vector.shape_cast %180 : vector<14x2xf32> to vector<1x14x2xf32>
    tpu.vector_store %arg4[%c7_101, %c0_102, %c0_103], %183 {strides = array<i32>} : memref<8x14x2xf32, #tpu.memory_space<vmem>>, vector<1x14x2xf32>,
    return
  }
  func.func @transform_0(%arg0: i32) -> (i32, i32, i32) {
    %c0_i32 = arith.constant 0 : i32
    %c0_i32_0 = arith.constant 0 : i32
    %c0_i32_1 = arith.constant 0 : i32
    return %c0_i32, %c0_i32_0, %arg0 : i32, i32, i32
  }
  func.func @transform_1(%arg0: i32) -> i32 {
    %c0_i32 = arith.constant 0 : i32
    %c0_i32_0 = arith.constant 0 : i32
    return %c0_i32 : i32
  }
  func.func @transform_2(%arg0: i32) -> i32 {
    %c0_i32 = arith.constant 0 : i32
    %c0_i32_0 = arith.constant 0 : i32
    return %c0_i32 : i32
  }
  func.func @transform_3(%arg0: i32) -> (i32, i32, i32) {
    %c0_i32 = arith.constant 0 : i32
    %c0_i32_0 = arith.constant 0 : i32
    %c0_i32_1 = arith.constant 0 : i32
    return %c0_i32, %c0_i32_0, %arg0 : i32, i32, i32
  }
}

</mosaic_0001>

<llo_original>
// kernel: tpu_custom_call.1
$region0: #{tpu_custom_call.1}
  #allocation0 [shape = 'u32[]', space=smem, size = 0x4, offset = 0x4, fixed_abs, tag = 'smem constant byte address 0x4 - core index']
  #allocation1 [shape = 'u32[144,128]{1,0:T(1,128)}', space=vmem, size = 0x12000, scoped, tag = 'internal scratch']
  %s0 = inlined_call_operand.vmem [shape: f32[1,16,2], index: 0, kind: input, shape index: {}]
  %s1 = inlined_call_operand.vmem [shape: f32[24], index: 1, kind: input, shape index: {}]
  %s2 = inlined_call_operand.vmem [shape: f32[8], index: 2, kind: input, shape index: {}]
  %s3 = inlined_call_operand.vmem [shape: f32[8,14,2], index: 3, kind: output, shape index: {}]
  %s4 = sld [smem:[#allocation0]]
  $region30: #{tpu_custom_call.1} parent=0
    _
  %s6 = ssub.s32 1, %s4
  %s7 = scalar_select 0, %s6, %s4
  $region1: #{tpu_custom_call.1} parent=0
    #allocation2 [shape = 'u8[512]{0}', space=smem, size = 0x200, scoped, tag = 'input window, operand 1, single buffered']
    #allocation3 [shape = 's32[1]{0}', space=sflag, size = 0x4, scoped, tag = 'scoped memory for tpu_custom_call.1']
    #allocation4 [shape = 'u8[512]{0}', space=smem, size = 0x200, scoped, tag = 'input window, operand 2, single buffered']
    #allocation5 [shape = 's32[1]{0}', space=sflag, size = 0x4, scoped, tag = 'scoped memory for tpu_custom_call.1']
    %8 = vsyncpa [#allocation3], 0
    %9 = vsyncpa [#allocation5], 0
    // Predicated region
    $region2: #{tpu_custom_call.1} parent=1 // pred_check
      _
    $region3: #{tpu_custom_call.1} parent=1 // pred_check_branch
      %11 = sbr.rel (0) target = $region5
    $region4: #{tpu_custom_call.1} parent=1 // pred_region
      _
    $region5: #{tpu_custom_call.1} parent=1 // pred_fallthru
      _
    // Predicated region
    $region6: #{tpu_custom_call.1} parent=1 // pred_check
      _
    $region7: #{tpu_custom_call.1} parent=1 // pred_check_branch
      %13 = sbr.rel (0) target = $region9
    $region8: #{tpu_custom_call.1} parent=1 // pred_region
      %s15 = ssub.s32 16, 16
      %16 = vsyncadd [#allocation3], %s15
      %s18 = sshll.u32 %s1, 4
      %s19 = int_to_ptr.vmem [resolvable:$true] %s18
      %21 = dma.vmem_to_smem %s19, 16, [#allocation2], [#allocation3]
    $region9: #{tpu_custom_call.1} parent=1 // pred_fallthru
      _
    // Predicated region
    $region10: #{tpu_custom_call.1} parent=1 // pred_check
      _
    $region11: #{tpu_custom_call.1} parent=1 // pred_check_branch
      %23 = sbr.rel (0) target = $region13
    $region12: #{tpu_custom_call.1} parent=1 // pred_region
      %s25 = ssub.s32 16, 16
      %26 = vsyncadd [#allocation5], %s25
      %s28 = sshll.u32 %s2, 4
      %s29 = int_to_ptr.vmem [resolvable:$true] %s28
      %31 = dma.vmem_to_smem %s29, 16, [#allocation4], [#allocation5]
    $region13: #{tpu_custom_call.1} parent=1 // pred_fallthru
      _
    // Predicated region
    $region14: #{tpu_custom_call.1} parent=1 // pred_check
      _
    $region15: #{tpu_custom_call.1} parent=1 // pred_check_branch
      %33 = sbr.rel (0) target = $region17
    $region16: #{tpu_custom_call.1} parent=1 // pred_region
      %34 = dma.done [#allocation3], 16
    $region17: #{tpu_custom_call.1} parent=1 // pred_fallthru
      _
    // Predicated region
    $region18: #{tpu_custom_call.1} parent=1 // pred_check
      _
    $region19: #{tpu_custom_call.1} parent=1 // pred_check_branch
      %36 = sbr.rel (0) target = $region21
    $region20: #{tpu_custom_call.1} parent=1 // pred_region
      %37 = dma.done [#allocation5], 16
    $region21: #{tpu_custom_call.1} parent=1 // pred_fallthru
      _
    %38 = sfence
    %s39 = sld [smem:[#allocation4]]
    %v40 = vstv %s39
    %s41 = sld [smem:[#allocation2]]
    %v42 = vld [vmem:[%s0] sm:$0xff]
    %v43 = vld [vmem:[%s0 + $0x8] sm:$0x3f]
    %v44 = vstv %s41
    %v45 = vmul.f32 %v44, %v42
    %v46 = vmul.f32 %v44, %v43
    %v47 = vadd.f32 %v40, %v45
    %v48 = vadd.f32 %v40, %v46
    %s49 = sld [smem:[#allocation2 + $0x8]]
    %v50 = vld [vmem:[%s0 + $0x1] sm:$0xff]
    %v51 = vld [vmem:[%s0 + $0x9] sm:$0x3f]
    %v52 = vstv %s49
    %v53 = vmul.f32 %v52, %v50
    %v54 = vmul.f32 %v52, %v51
    %v55 = vadd.f32 %v47, %v53
    %v56 = vadd.f32 %v48, %v54
    %s57 = sld [smem:[#allocation2 + $0x10]]
    %v58 = vld [vmem:[%s0 + $0x2] sm:$0xff]
    %v59 = vld [vmem:[%s0 + $0xa] sm:$0x3f]
    %v60 = vstv %s57
    %v61 = vmul.f32 %v60, %v58
    %v62 = vmul.f32 %v60, %v59
    %v63 = vadd.f32 %v55, %v61
    %v64 = vadd.f32 %v56, %v62
    %vm65 = vcmask 15360
    %66 = vst.msk [vmem:[%s3] sm:$0xff] %vm65, %v63
    %vm67 = vcmask 13312
    %68 = vst.msk [vmem:[%s3 + $0x8] sm:$0x3f] %vm67, %v64
    %s69 = sld [smem:[#allocation4 + $0x1]]
    %v70 = vstv %s69
    %s71 = sld [smem:[#allocation2 + $0x1]]
    %v72 = vld [vmem:[%s0] sm:$0xff]
    %v73 = vld [vmem:[%s0 + $0x8] sm:$0x3f]
    %v74 = vstv %s71
    %v75 = vmul.f32 %v74, %v72
    %v76 = vmul.f32 %v74, %v73
    %v77 = vadd.f32 %v70, %v75
    %v78 = vadd.f32 %v70, %v76
    %s79 = sld [smem:[#allocation2 + $0x9]]
    %v80 = vld [vmem:[%s0 + $0x1] sm:$0xff]
    %v81 = vld [vmem:[%s0 + $0x9] sm:$0x3f]
    %v82 = vstv %s79
    %v83 = vmul.f32 %v82, %v80
    %v84 = vmul.f32 %v82, %v81
    %v85 = vadd.f32 %v77, %v83
    %v86 = vadd.f32 %v78, %v84
    %s87 = sld [smem:[#allocation2 + $0x11]]
    %v88 = vld [vmem:[%s0 + $0x2] sm:$0xff]
    %v89 = vld [vmem:[%s0 + $0xa] sm:$0x3f]
    %v90 = vstv %s87
    %v91 = vmul.f32 %v90, %v88
    %v92 = vmul.f32 %v90, %v89
    %v93 = vadd.f32 %v85, %v91
    %v94 = vadd.f32 %v86, %v92
    %s95 = scalar_lea.vmem %s3, 16
    %96 = vst.msk [vmem:[%s95] sm:$0xff] %vm65, %v93
    %97 = vst.msk [vmem:[%s95 + $0x8] sm:$0x3f] %vm67, %v94
    %s98 = sld [smem:[#allocation4 + $0x2]]
    %v99 = vstv %s98
    %s100 = sld [smem:[#allocation2 + $0x2]]
    %v101 = vld [vmem:[%s0] sm:$0xff]
    %v102 = vld [vmem:[%s0 + $0x8] sm:$0x3f]
    %v103 = vstv %s100
    %v104 = vmul.f32 %v103, %v101
    %v105 = vmul.f32 %v103, %v102
    %v106 = vadd.f32 %v99, %v104
    %v107 = vadd.f32 %v99, %v105
    %s108 = sld [smem:[#allocation2 + $0xa]]
    %v109 = vld [vmem:[%s0 + $0x1] sm:$0xff]
    %v110 = vld [vmem:[%s0 + $0x9] sm:$0x3f]
    %v111 = vstv %s108
    %v112 = vmul.f32 %v111, %v109
    %v113 = vmul.f32 %v111, %v110
    %v114 = vadd.f32 %v106, %v112
    %v115 = vadd.f32 %v107, %v113
    %s116 = sld [smem:[#allocation2 + $0x12]]
    %v117 = vld [vmem:[%s0 + $0x2] sm:$0xff]
    %v118 = vld [vmem:[%s0 + $0xa] sm:$0x3f]
    %v119 = vstv %s116
    %v120 = vmul.f32 %v119, %v117
    %v121 = vmul.f32 %v119, %v118
    %v122 = vadd.f32 %v114, %v120
    %v123 = vadd.f32 %v115, %v121
    %s124 = scalar_lea.vmem %s3, 32
    %125 = vst.msk [vmem:[%s124] sm:$0xff] %vm65, %v122
    %126 = vst.msk [vmem:[%s124 + $0x8] sm:$0x3f] %vm67, %v123
    %s127 = sld [smem:[#allocation4 + $0x3]]
    %v128 = vstv %s127
    %s129 = sld [smem:[#allocation2 + $0x3]]
    %v130 = vld [vmem:[%s0] sm:$0xff]
    %v131 = vld [vmem:[%s0 + $0x8] sm:$0x3f]
    %v132 = vstv %s129
    %v133 = vmul.f32 %v132, %v130
    %v134 = vmul.f32 %v132, %v131
    %v135 = vadd.f32 %v128, %v133
    %v136 = vadd.f32 %v128, %v134
    %s137 = sld [smem:[#allocation2 + $0xb]]
    %v138 = vld [vmem:[%s0 + $0x1] sm:$0xff]
    %v139 = vld [vmem:[%s0 + $0x9] sm:$0x3f]
    %v140 = vstv %s137
    %v141 = vmul.f32 %v140, %v138
    %v142 = vmul.f32 %v140, %v139
    %v143 = vadd.f32 %v135, %v141
    %v144 = vadd.f32 %v136, %v142
    %s145 = sld [smem:[#allocation2 + $0x13]]
    %v146 = vld [vmem:[%s0 + $0x2] sm:$0xff]
    %v147 = vld [vmem:[%s0 + $0xa] sm:$0x3f]
    %v148 = vstv %s145
    %v149 = vmul.f32 %v148, %v146
    %v150 = vmul.f32 %v148, %v147
    %v151 = vadd.f32 %v143, %v149
    %v152 = vadd.f32 %v144, %v150
    %s153 = scalar_lea.vmem %s3, 48
    %154 = vst.msk [vmem:[%s153] sm:$0xff] %vm65, %v151
    %155 = vst.msk [vmem:[%s153 + $0x8] sm:$0x3f] %vm67, %v152
    %s156 = sld [smem:[#allocation4 + $0x4]]
    %v157 = vstv %s156
    %s158 = sld [smem:[#allocation2 + $0x4]]
    %v159 = vld [vmem:[%s0] sm:$0xff]
    %v160 = vld [vmem:[%s0 + $0x8] sm:$0x3f]
    %v161 = vstv %s158
    %v162 = vmul.f32 %v161, %v159
    %v163 = vmul.f32 %v161, %v160
    %v164 = vadd.f32 %v157, %v162
    %v165 = vadd.f32 %v157, %v163
    %s166 = sld [smem:[#allocation2 + $0xc]]
    %v167 = vld [vmem:[%s0 + $0x1] sm:$0xff]
    %v168 = vld [vmem:[%s0 + $0x9] sm:$0x3f]
    %v169 = vstv %s166
    %v170 = vmul.f32 %v169, %v167
    %v171 = vmul.f32 %v169, %v168
    %v172 = vadd.f32 %v164, %v170
    %v173 = vadd.f32 %v165, %v171
    %s174 = sld [smem:[#allocation2 + $0x14]]
    %v175 = vld [vmem:[%s0 + $0x2] sm:$0xff]
    %v176 = vld [vmem:[%s0 + $0xa] sm:$0x3f]
    %v177 = vstv %s174
    %v178 = vmul.f32 %v177, %v175
    %v179 = vmul.f32 %v177, %v176
    %v180 = vadd.f32 %v172, %v178
    %v181 = vadd.f32 %v173, %v179
    %s182 = scalar_lea.vmem %s3, 64
    %183 = vst.msk [vmem:[%s182] sm:$0xff] %vm65, %v180
    %184 = vst.msk [vmem:[%s182 + $0x8] sm:$0x3f] %vm67, %v181
    %s185 = sld [smem:[#allocation4 + $0x5]]
    %v186 = vstv %s185
    %s187 = sld [smem:[#allocation2 + $0x5]]
    %v188 = vld [vmem:[%s0] sm:$0xff]
    %v189 = vld [vmem:[%s0 + $0x8] sm:$0x3f]
    %v190 = vstv %s187
    %v191 = vmul.f32 %v190, %v188
    %v192 = vmul.f32 %v190, %v189
    %v193 = vadd.f32 %v186, %v191
    %v194 = vadd.f32 %v186, %v192
    %s195 = sld [smem:[#allocation2 + $0xd]]
    %v196 = vld [vmem:[%s0 + $0x1] sm:$0xff]
    %v197 = vld [vmem:[%s0 + $0x9] sm:$0x3f]
    %v198 = vstv %s195
    %v199 = vmul.f32 %v198, %v196
    %v200 = vmul.f32 %v198, %v197
    %v201 = vadd.f32 %v193, %v199
    %v202 = vadd.f32 %v194, %v200
    %s203 = sld [smem:[#allocation2 + $0x15]]
    %v204 = vld [vmem:[%s0 + $0x2] sm:$0xff]
    %v205 = vld [vmem:[%s0 + $0xa] sm:$0x3f]
    %v206 = vstv %s203
    %v207 = vmul.f32 %v206, %v204
    %v208 = vmul.f32 %v206, %v205
    %v209 = vadd.f32 %v201, %v207
    %v210 = vadd.f32 %v202, %v208
    %s211 = scalar_lea.vmem %s3, 80
    %212 = vst.msk [vmem:[%s211] sm:$0xff] %vm65, %v209
    %213 = vst.msk [vmem:[%s211 + $0x8] sm:$0x3f] %vm67, %v210
    %s214 = sld [smem:[#allocation4 + $0x6]]
    %v215 = vstv %s214
    %s216 = sld [smem:[#allocation2 + $0x6]]
    %v217 = vld [vmem:[%s0] sm:$0xff]
    %v218 = vld [vmem:[%s0 + $0x8] sm:$0x3f]
    %v219 = vstv %s216
    %v220 = vmul.f32 %v219, %v217
    %v221 = vmul.f32 %v219, %v218
    %v222 = vadd.f32 %v215, %v220
    %v223 = vadd.f32 %v215, %v221
    %s224 = sld [smem:[#allocation2 + $0xe]]
    %v225 = vld [vmem:[%s0 + $0x1] sm:$0xff]
    %v226 = vld [vmem:[%s0 + $0x9] sm:$0x3f]
    %v227 = vstv %s224
    %v228 = vmul.f32 %v227, %v225
    %v229 = vmul.f32 %v227, %v226
    %v230 = vadd.f32 %v222, %v228
    %v231 = vadd.f32 %v223, %v229
    %s232 = sld [smem:[#allocation2 + $0x16]]
    %v233 = vld [vmem:[%s0 + $0x2] sm:$0xff]
    %v234 = vld [vmem:[%s0 + $0xa] sm:$0x3f]
    %v235 = vstv %s232
    %v236 = vmul.f32 %v235, %v233
    %v237 = vmul.f32 %v235, %v234
    %v238 = vadd.f32 %v230, %v236
    %v239 = vadd.f32 %v231, %v237
    %s240 = scalar_lea.vmem %s3, 96
    %241 = vst.msk [vmem:[%s240] sm:$0xff] %vm65, %v238
    %242 = vst.msk [vmem:[%s240 + $0x8] sm:$0x3f] %vm67, %v239
    %s243 = sld [smem:[#allocation4 + $0x7]]
    %v244 = vstv %s243
    %s245 = sld [smem:[#allocation2 + $0x7]]
    %v246 = vld [vmem:[%s0] sm:$0xff]
    %v247 = vld [vmem:[%s0 + $0x8] sm:$0x3f]
    %v248 = vstv %s245
    %v249 = vmul.f32 %v248, %v246
    %v250 = vmul.f32 %v248, %v247
    %v251 = vadd.f32 %v244, %v249
    %v252 = vadd.f32 %v244, %v250
    %s253 = sld [smem:[#allocation2 + $0xf]]
    %v254 = vld [vmem:[%s0 + $0x1] sm:$0xff]
    %v255 = vld [vmem:[%s0 + $0x9] sm:$0x3f]
    %v256 = vstv %s253
    %v257 = vmul.f32 %v256, %v254
    %v258 = vmul.f32 %v256, %v255
    %v259 = vadd.f32 %v251, %v257
    %v260 = vadd.f32 %v252, %v258
    %s261 = sld [smem:[#allocation2 + $0x17]]
    %v262 = vld [vmem:[%s0 + $0x2] sm:$0xff]
    %v263 = vld [vmem:[%s0 + $0xa] sm:$0x3f]
    %v264 = vstv %s261
    %v265 = vmul.f32 %v264, %v262
    %v266 = vmul.f32 %v264, %v263
    %v267 = vadd.f32 %v259, %v265
    %v268 = vadd.f32 %v260, %v266
    %s269 = scalar_lea.vmem %s3, 112
    %270 = vst.msk [vmem:[%s269] sm:$0xff] %vm65, %v267
    %271 = vst.msk [vmem:[%s269 + $0x8] sm:$0x3f] %vm67, %v268
    // Predicated region
    $region22: #{tpu_custom_call.1} parent=1 // pred_check
      _
    $region23: #{tpu_custom_call.1} parent=1 // pred_check_branch
      %273 = sbr.rel (0) target = $region25
    $region24: #{tpu_custom_call.1} parent=1 // pred_region
      _
    $region25: #{tpu_custom_call.1} parent=1 // pred_fallthru
      _
    // Predicated region
    $region26: #{tpu_custom_call.1} parent=1 // pred_check
      _
    $region27: #{tpu_custom_call.1} parent=1 // pred_check_branch
      %275 = sbr.rel (0) target = $region29
    $region28: #{tpu_custom_call.1} parent=1 // pred_region
      _
    $region29: #{tpu_custom_call.1} parent=1 // pred_fallthru
      _
    %276 = vsyncpa [#allocation3], 1
    %277 = vsyncpa [#allocation5], 1

</llo_original>
